<compile_context>
chip_gen: v7x
topology: tpu7x:2x2x1
jax: 0.10.0
libtpu: 0.0.40
codegen_flags: <defaults>
</compile_context>

<pallas_src>
import functools

import jax
import jax.numpy as jnp
from jax.experimental import pallas as pl
from jax.experimental.pallas import tpu as pltpu

hidden_layers = [16, 8, 8, 8]
num_items = 2079
num_users = 50
embedding_size = hidden_layers[0] // 2  # 8, so cat([u, i]) has width 16


def _round_up(n, m):
    return ((n + m - 1) // m) * m


def _choose_batch_tiling(B, max_tile_b, min_tiles=2):
    """Pick a lane-axis batch tile tb (multiple of 128) and padded batch size.

    tb is derived from B so padding stays small, capped at max_tile_b, and the
    grid keeps >= min_tiles steps when B allows it (so "parallel" can shard
    tiles across v7x's 2 TensorCores).
    """
    b128 = _round_up(max(B, 1), 128)
    n_tiles = pl.cdiv(b128, max_tile_b)
    if b128 >= min_tiles * 128:
        n_tiles = max(n_tiles, min_tiles)
    tb = _round_up(pl.cdiv(b128, n_tiles), 128)
    b_pad = _round_up(b128, tb)
    return tb, b_pad


def mlp_kernel(x_ref, w2_ref, b2_ref, w3_ref, b3_ref, o_ref):
    """Per batch-tile: relu(x) -> relu(W2 @ . + b2) -> relu(W3 @ . + b3).

    x_ref already holds W1 @ cat(u, i) + b1 for this tile (layer 1 + bias
    folded into the embedding tables in the wrapper).  Shapes: x (8, TB),
    weights (out, in), biases (out, 1), output (8, TB) -- batch on lanes.
    """
    h = jnp.maximum(x_ref[...].astype(jnp.float32), 0.0)                 # layer 1
    h = jnp.dot(w2_ref[...], h, preferred_element_type=jnp.float32) + b2_ref[...]
    h = jnp.maximum(h, 0.0)                                              # layer 2
    h = jnp.dot(w3_ref[...], h, preferred_element_type=jnp.float32) + b3_ref[...]
    h = jnp.maximum(h, 0.0)                                              # layer 3
    o_ref[...] = h.astype(o_ref.dtype)


@functools.partial(jax.jit, static_argnames=("max_tile_b", "stream_bf16"))
def mlp_forward(user_indices, item_indices, params, *, max_tile_b=32768,
                stream_bf16=False):
    """Embedding gather (folded with layer 1 + b1) in XLA + fused MLP in Pallas."""
    E = embedding_size
    h1, h2, h3 = hidden_layers[1], hidden_layers[2], hidden_layers[3]
    w1, w2, w3 = params["w1"], params["w2"], params["w3"]          # (out, in)
    b2 = params["b2"].reshape(h2, 1)
    b3 = params["b3"].reshape(h3, 1)

    # Fold the first Linear *and its bias* into the embedding tables (exact
    # algebra).  Tables are pre-transposed so the gather produces the (8, B)
    # feature-major activation directly -- no separate full-array transpose.
    hi = jax.lax.Precision.HIGHEST
    uf_t = (jnp.dot(params["user_embedding"], w1[:, :E].T, precision=hi)
            + params["b1"]).T                                          # (8, num_users)
    itf_t = jnp.dot(params["item_embedding"], w1[:, E:].T, precision=hi).T  # (8, num_items)
    x = jnp.take(uf_t, user_indices, axis=1) + jnp.take(itf_t, item_indices, axis=1)  # (8, B)

    stream_dtype = jnp.bfloat16 if stream_bf16 else jnp.float32
    x = x.astype(stream_dtype)

    B = user_indices.shape[0]
    tb, b_pad = _choose_batch_tiling(B, max_tile_b)
    if b_pad != B:
        x = jnp.pad(x, ((0, 0), (0, b_pad - B)))
    grid = (b_pad // tb,)

    const = lambda i: (0, 0)  # weights/biases: fetched once, VMEM-resident
    out_fm = pl.pallas_call(
        mlp_kernel,
        out_shape=jax.ShapeDtypeStruct((h3, b_pad), stream_dtype),
        grid_spec=pltpu.PrefetchScalarGridSpec(
            num_scalar_prefetch=0,
            grid=grid,
            in_specs=[
                pl.BlockSpec((h1, tb), lambda i: (0, i)),  # streamed activation tile
                pl.BlockSpec((h2, h1), const),             # w2
                pl.BlockSpec((h2, 1), const),              # b2
                pl.BlockSpec((h3, h2), const),             # w3
                pl.BlockSpec((h3, 1), const),              # b3
            ],
            out_specs=pl.BlockSpec((h3, tb), lambda i: (0, i)),  # lane-dense stores
        ),
        compiler_params=pltpu.CompilerParams(
            dimension_semantics=("parallel",),   # shard batch tiles across v7x's 2 TCs
            vmem_limit_bytes=32 << 20,           # headroom for big tiles on v5e's 16 MiB default
        ),
    )(x, w2, b2, w3, b3)

    # Back to the PyTorch (B, out) batch-major layout.  (If a downstream
    # consumer accepted feature-major (8, B) this transpose could be dropped.)
    return out_fm[:, :B].T


def init_params(key):
    """Deterministic parameter init mirroring the PyTorch module shapes."""
    ks = jax.random.split(key, 8)
    p = {}
    # nn.Embedding default init: N(0, 1)
    p["user_embedding"] = jax.random.normal(ks[0], (num_users, embedding_size), jnp.float32)
    p["item_embedding"] = jax.random.normal(ks[1], (num_items, embedding_size), jnp.float32)
    # nn.Linear init (uniform bound 1/sqrt(fan_in)); stored PyTorch-style (out, in)
    dims = list(zip(hidden_layers[:-1], hidden_layers[1:]))  # [(16,8),(8,8),(8,8)]
    for i, (fin, fout) in enumerate(dims, start=1):
        bound = 1.0 / (fin ** 0.5)
        p[f"w{i}"] = jax.random.uniform(ks[2 * i], (fout, fin), jnp.float32, -bound, bound)
        p[f"b{i}"] = jax.random.uniform(ks[2 * i + 1], (fout,), jnp.float32, -bound, bound)
    return p


def reference_forward(user_indices, item_indices, params):
    """Pure-JAX, unfused reference matching the PyTorch module exactly."""
    u = jnp.take(params["user_embedding"], user_indices, axis=0)
    it = jnp.take(params["item_embedding"], item_indices, axis=0)
    x = jnp.concatenate([u, it], axis=-1)
    for i in (1, 2, 3):
        x = jnp.maximum(x @ params[f"w{i}"].T + params[f"b{i}"], 0.0)
    return x


if __name__ == "__main__":
    key = jax.random.PRNGKey(0)
    pkey, ukey, ikey, ukey2, ikey2 = jax.random.split(key, 5)
    params = init_params(pkey)

    # Small demo batch (single tile).
    B = 8
    user_idx = jax.random.randint(ukey, (B,), 0, num_users, dtype=jnp.int32)
    item_idx = jax.random.randint(ikey, (B,), 0, num_items, dtype=jnp.int32)
    out = jax.block_until_ready(mlp_forward(user_idx, item_idx, params))
    ref = reference_forward(user_idx, item_idx, params)
    assert out.shape == (B, hidden_layers[-1]), out.shape
    assert jnp.allclose(out, ref, atol=1e-5, rtol=1e-4), float(jnp.max(jnp.abs(out - ref)))

    # Larger batch exercising the multi-tile grid + padding path (2 tiles).
    B2 = 2500
    user_idx2 = jax.random.randint(ukey2, (B2,), 0, num_users, dtype=jnp.int32)
    item_idx2 = jax.random.randint(ikey2, (B2,), 0, num_items, dtype=jnp.int32)
    out2 = jax.block_until_ready(mlp_forward(user_idx2, item_idx2, params))
    ref2 = reference_forward(user_idx2, item_idx2, params)
    assert out2.shape == (B2, hidden_layers[-1]), out2.shape
    assert jnp.allclose(out2, ref2, atol=1e-5, rtol=1e-4), float(jnp.max(jnp.abs(out2 - ref2)))

    # Optional bf16-streaming path (halves HBM bytes; not bit-exact vs f32).
    out3 = jax.block_until_ready(mlp_forward(user_idx2, item_idx2, params, stream_bf16=True))
    assert jnp.allclose(out3.astype(jnp.float32), ref2, atol=3e-2, rtol=3e-2)

    print("KERNEL_OK")
</pallas_src>

<mosaic_0001>
module attributes {stable_mosaic.version = 11 : i64} {
  func.func @mlp_kernel(%arg0: i32, %arg1: memref<8x128xf32, #tpu.memory_space<vmem>>, %arg2: memref<8x8xf32, #tpu.memory_space<vmem>>, %arg3: memref<8x1xf32, #tpu.memory_space<vmem>>, %arg4: memref<8x8xf32, #tpu.memory_space<vmem>>, %arg5: memref<8x1xf32, #tpu.memory_space<vmem>>, %arg6: memref<8x128xf32, #tpu.memory_space<vmem>>) attributes {dimension_semantics = [#tpu.dimension_semantics<parallel>], iteration_bounds = array<i64: 1>, scalar_prefetch = 0 : i64, scratch_operands = 0 : i64, tpu.core_type = #tpu.core_type<tc>, window_params = [{transform_indices = @transform_0, window_bounds = array<i64: 8, 128>}, {pipeline_mode = #tpu.pipeline_mode<synchronous>, transform_indices = @transform_1, window_bounds = array<i64: 8, 8>}, {pipeline_mode = #tpu.pipeline_mode<synchronous>, transform_indices = @transform_2, window_bounds = array<i64: 8, 1>}, {pipeline_mode = #tpu.pipeline_mode<synchronous>, transform_indices = @transform_3, window_bounds = array<i64: 8, 8>}, {pipeline_mode = #tpu.pipeline_mode<synchronous>, transform_indices = @transform_4, window_bounds = array<i64: 8, 1>}, {transform_indices = @transform_5, window_bounds = array<i64: 8, 128>}]} {
    %c0 = arith.constant 0 : index
    %c0_0 = arith.constant 0 : index
    %0 = vector.load %arg1[%c0, %c0_0] : memref<8x128xf32, #tpu.memory_space<vmem>>, vector<8x128xf32>
    %cst = arith.constant 0.000000e+00 : f32
    %1 = vector.broadcast %cst : f32 to vector<8x128xf32>
    %2 = arith.maximumf %0, %1 : vector<8x128xf32>
    %c0_1 = arith.constant 0 : index
    %c0_2 = arith.constant 0 : index
    %3 = vector.load %arg2[%c0_1, %c0_2] : memref<8x8xf32, #tpu.memory_space<vmem>>, vector<8x8xf32>
    %cst_3 = arith.constant dense<0.000000e+00> : vector<8x128xf32>
    %4 = tpu.matmul %3, %2, %cst_3 {dimension_numbers = #tpu.dot_dimension_numbers<[1], [0], [0], [1], [0, 0, 1, 1], [], []>} : vector<8x8xf32>, vector<8x128xf32>, vector<8x128xf32> -> vector<8x128xf32>
    %c0_4 = arith.constant 0 : index
    %c0_5 = arith.constant 0 : index
    %5 = vector.load %arg3[%c0_4, %c0_5] : memref<8x1xf32, #tpu.memory_space<vmem>>, vector<8x1xf32>
    %6 = vector.broadcast %5 : vector<8x1xf32> to vector<8x128xf32>
    %7 = arith.addf %4, %6 : vector<8x128xf32>
    %cst_6 = arith.constant 0.000000e+00 : f32
    %8 = vector.broadcast %cst_6 : f32 to vector<8x128xf32>
    %9 = arith.maximumf %7, %8 : vector<8x128xf32>
    %c0_7 = arith.constant 0 : index
    %c0_8 = arith.constant 0 : index
    %10 = vector.load %arg4[%c0_7, %c0_8] : memref<8x8xf32, #tpu.memory_space<vmem>>, vector<8x8xf32>
    %cst_9 = arith.constant dense<0.000000e+00> : vector<8x128xf32>
    %11 = tpu.matmul %10, %9, %cst_9 {dimension_numbers = #tpu.dot_dimension_numbers<[1], [0], [0], [1], [0, 0, 1, 1], [], []>} : vector<8x8xf32>, vector<8x128xf32>, vector<8x128xf32> -> vector<8x128xf32>
    %c0_10 = arith.constant 0 : index
    %c0_11 = arith.constant 0 : index
    %12 = vector.load %arg5[%c0_10, %c0_11] : memref<8x1xf32, #tpu.memory_space<vmem>>, vector<8x1xf32>
    %13 = vector.broadcast %12 : vector<8x1xf32> to vector<8x128xf32>
    %14 = arith.addf %11, %13 : vector<8x128xf32>
    %cst_12 = arith.constant 0.000000e+00 : f32
    %15 = vector.broadcast %cst_12 : f32 to vector<8x128xf32>
    %16 = arith.maximumf %14, %15 : vector<8x128xf32>
    %c0_13 = arith.constant 0 : index
    %c0_14 = arith.constant 0 : index
    %17 = vector.load %arg6[%c0_13, %c0_14] : memref<8x128xf32, #tpu.memory_space<vmem>>, vector<8x128xf32>
    tpu.vector_store %arg6[%c0_13, %c0_14], %16 {strides = array<i32>} : memref<8x128xf32, #tpu.memory_space<vmem>>, vector<8x128xf32>,
    return
  }
  func.func @transform_0(%arg0: i32) -> (i32, i32) {
    %c0_i32 = arith.constant 0 : i32
    %c0_i32_0 = arith.constant 0 : i32
    return %c0_i32, %arg0 : i32, i32
  }
  func.func @transform_1(%arg0: i32) -> (i32, i32) {
    %c0_i32 = arith.constant 0 : i32
    %c0_i32_0 = arith.constant 0 : i32
    %c0_i32_1 = arith.constant 0 : i32
    return %c0_i32, %c0_i32_0 : i32, i32
  }
  func.func @transform_2(%arg0: i32) -> (i32, i32) {
    %c0_i32 = arith.constant 0 : i32
    %c0_i32_0 = arith.constant 0 : i32
    %c0_i32_1 = arith.constant 0 : i32
    return %c0_i32, %c0_i32_0 : i32, i32
  }
  func.func @transform_3(%arg0: i32) -> (i32, i32) {
    %c0_i32 = arith.constant 0 : i32
    %c0_i32_0 = arith.constant 0 : i32
    %c0_i32_1 = arith.constant 0 : i32
    return %c0_i32, %c0_i32_0 : i32, i32
  }
  func.func @transform_4(%arg0: i32) -> (i32, i32) {
    %c0_i32 = arith.constant 0 : i32
    %c0_i32_0 = arith.constant 0 : i32
    %c0_i32_1 = arith.constant 0 : i32
    return %c0_i32, %c0_i32_0 : i32, i32
  }
  func.func @transform_5(%arg0: i32) -> (i32, i32) {
    %c0_i32 = arith.constant 0 : i32
    %c0_i32_0 = arith.constant 0 : i32
    return %c0_i32, %arg0 : i32, i32
  }
}

</mosaic_0001>

<llo_original>
// kernel: mlp_forward.1
$region0: #{mlp_forward.1}
  #allocation0 [shape = 'u32[]', space=smem, size = 0x4, offset = 0x4, fixed_abs, tag = 'smem constant byte address 0x4 - core index']
  #allocation1 [shape = 'u32[144,128]{1,0:T(1,128)}', space=vmem, size = 0x12000, scoped, tag = 'internal scratch']
  %s0 = inlined_call_operand.vmem [shape: f32[8,128], index: 0, kind: input, shape index: {}]
  %s1 = inlined_call_operand.vmem [shape: f32[8,8], index: 1, kind: input, shape index: {}]
  %s2 = inlined_call_operand.vmem [shape: f32[8,1], index: 2, kind: input, shape index: {}]
  %s3 = inlined_call_operand.vmem [shape: f32[8,8], index: 3, kind: input, shape index: {}]
  %s4 = inlined_call_operand.vmem [shape: f32[8,1], index: 4, kind: input, shape index: {}]
  %s5 = inlined_call_operand.vmem [shape: f32[8,128], index: 5, kind: output, shape index: {}]
  %s6 = sld [smem:[#allocation0]]
  $region30: #{mlp_forward.1} parent=0
    _
  %s8 = ssub.s32 1, %s6
  %s9 = scalar_select 0, %s8, %s6
  // Predicated region
  $region2: #{mlp_forward.1} parent=0 // pred_check
    _
  $region3: #{mlp_forward.1} parent=0 // pred_check_branch
    %11 = sbr.rel (0) target = $region5
  $region4: #{mlp_forward.1} parent=0 // pred_region
    _
  $region5: #{mlp_forward.1} parent=0 // pred_fallthru
    _
  // Predicated region
  $region6: #{mlp_forward.1} parent=0 // pred_check
    _
  $region7: #{mlp_forward.1} parent=0 // pred_check_branch
    %13 = sbr.rel (0) target = $region9
  $region8: #{mlp_forward.1} parent=0 // pred_region
    _
  $region9: #{mlp_forward.1} parent=0 // pred_fallthru
    _
  // Predicated region
  $region10: #{mlp_forward.1} parent=0 // pred_check
    _
  $region11: #{mlp_forward.1} parent=0 // pred_check_branch
    %15 = sbr.rel (0) target = $region13
  $region12: #{mlp_forward.1} parent=0 // pred_region
    _
  $region13: #{mlp_forward.1} parent=0 // pred_fallthru
    _
  // Predicated region
  $region14: #{mlp_forward.1} parent=0 // pred_check
    _
  $region15: #{mlp_forward.1} parent=0 // pred_check_branch
    %17 = sbr.rel (0) target = $region17
  $region16: #{mlp_forward.1} parent=0 // pred_region
    _
  $region17: #{mlp_forward.1} parent=0 // pred_fallthru
    _
  // Predicated region
  $region18: #{mlp_forward.1} parent=0 // pred_check
    _
  $region19: #{mlp_forward.1} parent=0 // pred_check_branch
    %19 = sbr.rel (0) target = $region21
  $region20: #{mlp_forward.1} parent=0 // pred_region
    _
  $region21: #{mlp_forward.1} parent=0 // pred_fallthru
    _
  %v20 = vld [vmem:[%s0] sm:$0xff]
  %v21 = vmax.f32 %v20, 0.0
  %v22 = vld [vmem:[%s1] sm:$0xff]
  %v23 = vld [vmem:[%s2] sm:$0xff]
  %25 = vset.pattern.permute.xlu0 0
  %26 = vperm.xlu0 %25, %v23
  %v27 = vpop.permute.xlu0 %26
  %vm29 = vcmask 64512
  %v31 = vsel %vm29, %v22, 0
  %33 = vmatprep.subr.mxu0 0.0
  %34 = vmatpush1.msra.mxu0 %v21
  %35 = vmatprep.subr.mxu0 0.0
  %36 = vmatpush1.msra.mxu0 0.0
  %37 = vmatprep.subr.mxu0 0.0
  %38 = vmatpush1.msra.mxu0 0.0
  %39 = vmatprep.subr.mxu0 0.0
  %40 = vmatpush1.msra.mxu0 0.0
  %41 = vmatprep.subr.mxu0 0.0
  %42 = vmatpush1.msra.mxu0 0.0
  %43 = vmatprep.subr.mxu0 0.0
  %44 = vmatpush1.msra.mxu0 0.0
  %45 = vmatprep.subr.mxu0 0.0
  %46 = vmatpush1.msra.mxu0 0.0
  %47 = vmatprep.subr.mxu0 0.0
  %48 = vmatpush1.msra.mxu0 0.0
  %49 = vmatprep.subr.mxu0 0.0
  %50 = vmatpush1.msra.mxu0 0.0
  %51 = vmatprep.subr.mxu0 0.0
  %52 = vmatpush1.msra.mxu0 0.0
  %53 = vmatprep.subr.mxu0 0.0
  %54 = vmatpush1.msra.mxu0 0.0
  %55 = vmatprep.subr.mxu0 0.0
  %56 = vmatpush1.msra.mxu0 0.0
  %57 = vmatprep.subr.mxu0 0.0
  %58 = vmatpush1.msra.mxu0 0.0
  %59 = vmatprep.subr.mxu0 0.0
  %60 = vmatpush1.msra.mxu0 0.0
  %61 = vmatprep.subr.mxu0 0.0
  %62 = vmatpush1.msra.mxu0 0.0
  %63 = vmatprep.subr.mxu0 0.0
  %64 = vmatpush1.msra.mxu0 0.0
  %65 = vmatprep.subr.mxu0 0.0
  %66 = vmatpush1.msra.mxu0 0.0
  %67 = vmatprep.subr.mxu0 0.0
  %68 = vmatpush1.msra.mxu0 0.0
  %69 = vmatprep.subr.mxu0 0.0
  %70 = vmatpush1.msra.mxu0 0.0
  %71 = vmatprep.subr.mxu0 0.0
  %72 = vmatpush1.msra.mxu0 0.0
  %73 = vmatprep.subr.mxu0 0.0
  %74 = vmatpush1.msra.mxu0 0.0
  %75 = vmatprep.subr.mxu0 0.0
  %76 = vmatpush1.msra.mxu0 0.0
  %77 = vmatprep.subr.mxu0 0.0
  %78 = vmatpush1.msra.mxu0 0.0
  %79 = vmatprep.subr.mxu0 0.0
  %80 = vmatpush1.msra.mxu0 0.0
  %81 = vmatprep.subr.mxu0 0.0
  %82 = vmatpush1.msra.mxu0 0.0
  %83 = vmatprep.subr.mxu0 0.0
  %84 = vmatpush1.msra.mxu0 0.0
  %85 = vmatprep.subr.mxu0 0.0
  %86 = vmatpush1.msra.mxu0 0.0
  %87 = vmatprep.subr.mxu0 0.0
  %88 = vmatpush1.msra.mxu0 0.0
  %89 = vmatprep.subr.mxu0 0.0
  %90 = vmatpush1.msra.mxu0 0.0
  %91 = vmatprep.subr.mxu0 0.0
  %92 = vmatpush1.msra.mxu0 0.0
  %93 = vmatprep.subr.mxu0 0.0
  %94 = vmatpush1.msra.mxu0 0.0
  %95 = vmatprep.subr.mxu0 0.0
  %96 = vmatpush1.msra.mxu0 0.0
  %97 = vmatprep.mubr.f32.mxu0 0.0
  %98 = vmatmul.mubr.f32.gmra.mrb[0].mxu0 %v31
  %v99 = vpop.f32.mrb[0].mxu0
  %v100 = vadd.f32 %v27, %v99
  %v101 = vpop.f32.mrb[0].mxu0
  %102 = vdwg.mxu0
  %v103 = vmax.f32 %v100, 0.0
  %v104 = vld [vmem:[%s3] sm:$0xff]
  %v105 = vld [vmem:[%s4] sm:$0xff]
  %107 = vset.pattern.permute.xlu0 0
  %108 = vperm.xlu0 %107, %v105
  %v109 = vpop.permute.xlu0 %108
  %v112 = vsel %vm29, %v104, 0
  %114 = vmatprep.subr.mxu0 0.0
  %115 = vmatpush1.msra.mxu0 %v103
  %116 = vmatprep.subr.mxu0 0.0
  %117 = vmatpush1.msra.mxu0 0.0
  %118 = vmatprep.subr.mxu0 0.0
  %119 = vmatpush1.msra.mxu0 0.0
  %120 = vmatprep.subr.mxu0 0.0
  %121 = vmatpush1.msra.mxu0 0.0
  %122 = vmatprep.subr.mxu0 0.0
  %123 = vmatpush1.msra.mxu0 0.0
  %124 = vmatprep.subr.mxu0 0.0
  %125 = vmatpush1.msra.mxu0 0.0
  %126 = vmatprep.subr.mxu0 0.0
  %127 = vmatpush1.msra.mxu0 0.0
  %128 = vmatprep.subr.mxu0 0.0
  %129 = vmatpush1.msra.mxu0 0.0
  %130 = vmatprep.subr.mxu0 0.0
  %131 = vmatpush1.msra.mxu0 0.0
  %132 = vmatprep.subr.mxu0 0.0
  %133 = vmatpush1.msra.mxu0 0.0
  %134 = vmatprep.subr.mxu0 0.0
  %135 = vmatpush1.msra.mxu0 0.0
  %136 = vmatprep.subr.mxu0 0.0
  %137 = vmatpush1.msra.mxu0 0.0
  %138 = vmatprep.subr.mxu0 0.0
  %139 = vmatpush1.msra.mxu0 0.0
  %140 = vmatprep.subr.mxu0 0.0
  %141 = vmatpush1.msra.mxu0 0.0
  %142 = vmatprep.subr.mxu0 0.0
  %143 = vmatpush1.msra.mxu0 0.0
  %144 = vmatprep.subr.mxu0 0.0
  %145 = vmatpush1.msra.mxu0 0.0
  %146 = vmatprep.subr.mxu0 0.0
  %147 = vmatpush1.msra.mxu0 0.0
  %148 = vmatprep.subr.mxu0 0.0
  %149 = vmatpush1.msra.mxu0 0.0
  %150 = vmatprep.subr.mxu0 0.0
  %151 = vmatpush1.msra.mxu0 0.0
  %152 = vmatprep.subr.mxu0 0.0
  %153 = vmatpush1.msra.mxu0 0.0
  %154 = vmatprep.subr.mxu0 0.0
  %155 = vmatpush1.msra.mxu0 0.0
  %156 = vmatprep.subr.mxu0 0.0
  %157 = vmatpush1.msra.mxu0 0.0
  %158 = vmatprep.subr.mxu0 0.0
  %159 = vmatpush1.msra.mxu0 0.0
  %160 = vmatprep.subr.mxu0 0.0
  %161 = vmatpush1.msra.mxu0 0.0
  %162 = vmatprep.subr.mxu0 0.0
  %163 = vmatpush1.msra.mxu0 0.0
  %164 = vmatprep.subr.mxu0 0.0
  %165 = vmatpush1.msra.mxu0 0.0
  %166 = vmatprep.subr.mxu0 0.0
  %167 = vmatpush1.msra.mxu0 0.0
  %168 = vmatprep.subr.mxu0 0.0
  %169 = vmatpush1.msra.mxu0 0.0
  %170 = vmatprep.subr.mxu0 0.0
  %171 = vmatpush1.msra.mxu0 0.0
  %172 = vmatprep.subr.mxu0 0.0
  %173 = vmatpush1.msra.mxu0 0.0
  %174 = vmatprep.subr.mxu0 0.0
  %175 = vmatpush1.msra.mxu0 0.0
  %176 = vmatprep.subr.mxu0 0.0
  %177 = vmatpush1.msra.mxu0 0.0
  %178 = vmatprep.mubr.f32.mxu0 0.0
  %179 = vmatmul.mubr.f32.gmra.mrb[0].mxu0 %v112
  %v180 = vpop.f32.mrb[0].mxu0
  %v181 = vadd.f32 %v109, %v180
  %v182 = vpop.f32.mrb[0].mxu0
  %183 = vdwg.mxu0
  %v184 = vmax.f32 %v181, 0.0
  %185 = vst [vmem:[%s5] sm:$0xff] %v184
  // Predicated region
  $region22: #{mlp_forward.1} parent=0 // pred_check
    _
  $region23: #{mlp_forward.1} parent=0 // pred_check_branch
    %187 = sbr.rel (0) target = $region25
  $region24: #{mlp_forward.1} parent=0 // pred_region
    _
  $region25: #{mlp_forward.1} parent=0 // pred_fallthru
    _
  // Predicated region
  $region26: #{mlp_forward.1} parent=0 // pred_check
    _
  $region27: #{mlp_forward.1} parent=0 // pred_check_branch
    %189 = sbr.rel (0) target = $region29
  $region28: #{mlp_forward.1} parent=0 // pred_region
    _
  $region29: #{mlp_forward.1} parent=0 // pred_fallthru
    _

</llo_original>
